<compile_context>
chip_gen: v7x
topology: tpu7x:2x2x1
jax: 0.10.0
libtpu: 0.0.40
codegen_flags: <defaults>
</compile_context>

<pallas_src>
import jax
import jax.numpy as jnp
from jax.experimental import pallas as pl
from jax.experimental.pallas import tpu as pltpu

LANES = 128
# Block row count; multiple of 32 so it is sublane-aligned for every dtype
# packing (f32: 8, bf16/f16: 16, int8/fp8: 32).
DEFAULT_BLOCK_ROWS = 4096


def _double_silu_kernel(x_ref, o_ref):
    # Compute in f32 regardless of the storage dtype; downcast at the store.
    x = x_ref[...].astype(jnp.float32)
    s_inner = 1.0 / (1.0 + jnp.exp(-x))        # sigmoid(x)        (EUP exp)
    silu_x = x * s_inner                       # x * sigmoid(x)    (VPU)
    s_outer = 1.0 / (1.0 + jnp.exp(-silu_x))   # sigmoid(silu(x))  (EUP exp)
    o_ref[...] = (x * s_outer).astype(o_ref.dtype)


def _sublane_packing(dtype) -> int:
    # Native sublane packing factor of the dtype (rows per (·,128) vreg tile).
    bits = jnp.dtype(dtype).itemsize * 8
    return max(8, (32 // max(bits, 1)) * 8)


def double_silu(x: jax.Array, *, block_rows: int = DEFAULT_BLOCK_ROWS) -> jax.Array:
    """DoubleSiLU(x) = x * sigmoid(x * sigmoid(x)), elementwise. Same shape/dtype."""
    orig_shape = x.shape
    orig_dtype = x.dtype
    n = x.size
    if n == 0:
        return x

    sub = _sublane_packing(orig_dtype)
    # Keep block_rows a multiple of every dtype's packing so a partial last
    # block along the sublane axis is always legal (masked by Pallas).
    block_rows = max(sub, (block_rows // 32) * 32)

    if n % LANES == 0:
        # Fast path: pure reshape, no extra HBM traffic for pad/slice.
        rows = n // LANES
        x2d = x.reshape(rows, LANES)
        needs_slice = False
    else:
        # Ragged path: pad the flat array up to a full (sub, 128) tile.
        rows = pl.cdiv(pl.cdiv(n, LANES), sub) * sub
        padded_n = rows * LANES
        x2d = jnp.pad(jnp.ravel(x), (0, padded_n - n)).reshape(rows, LANES)
        needs_slice = True

    # Clamp the tile for small tensors. Since block_rows % sub == 0, any
    # "ragged" br can only happen when br == rows, i.e. block == full array
    # dims, which is always a legal tile shape.
    br = min(block_rows, rows)
    grid = (pl.cdiv(rows, br),)

    out2d = pl.pallas_call(
        _double_silu_kernel,
        out_shape=jax.ShapeDtypeStruct((rows, LANES), orig_dtype),
        grid=grid,
        in_specs=[pl.BlockSpec((br, LANES), lambda i: (i, 0))],
        out_specs=pl.BlockSpec((br, LANES), lambda i: (i, 0)),
        compiler_params=pltpu.CompilerParams(
            dimension_semantics=("parallel",),
            vmem_limit_bytes=32 * 1024 * 1024,
        ),
    )(x2d)

    if needs_slice:
        return out2d.reshape(-1)[:n].reshape(orig_shape)
    return out2d.reshape(orig_shape)


def double_silu_ref(x: jax.Array) -> jax.Array:
    silu_x = x * jax.nn.sigmoid(x)
    return x * jax.nn.sigmoid(silu_x)


if __name__ == "__main__":
    key = jax.random.PRNGKey(0)

    # NCHW-style input (batch=2, channels=4, 16x16 spatial) -> 2048 elements,
    # hits the aligned fast path (16 rows x 128 lanes, no padding).
    x = jax.random.normal(key, (2, 4, 16, 16), dtype=jnp.float32)
    out = jax.block_until_ready(double_silu(x))
    ref = double_silu_ref(x)
    assert out.shape == x.shape and out.dtype == x.dtype
    assert jnp.allclose(out, ref, atol=1e-6, rtol=1e-6)

    # Ragged (pad) path: total size not divisible by 128.
    y = jax.random.normal(jax.random.PRNGKey(1), (3, 5, 7), dtype=jnp.float32)
    out_y = jax.block_until_ready(double_silu(y))
    assert out_y.shape == y.shape
    assert jnp.allclose(out_y, double_silu_ref(y), atol=1e-6, rtol=1e-6)

    # bf16 input: f32 compute inside the kernel, bf16 store.
    z = jax.random.normal(jax.random.PRNGKey(2), (4, 8, 32), dtype=jnp.bfloat16)
    out_z = jax.block_until_ready(double_silu(z))
    assert out_z.shape == z.shape and out_z.dtype == z.dtype
    assert jnp.allclose(out_z.astype(jnp.float32),
                        double_silu_ref(z.astype(jnp.float32)),
                        atol=1e-2, rtol=1e-2)

    print("KERNEL_OK")
</pallas_src>

<mosaic_0001>
module attributes {stable_mosaic.version = 11 : i64} {
  func.func @_double_silu_kernel(%arg0: i32, %arg1: memref<16x128xf32, #tpu.memory_space<vmem>>, %arg2: memref<16x128xf32, #tpu.memory_space<vmem>>) attributes {dimension_semantics = [#tpu.dimension_semantics<parallel>], iteration_bounds = array<i64: 1>, scalar_prefetch = 0 : i64, scratch_operands = 0 : i64, tpu.core_type = #tpu.core_type<tc>, window_params = [{transform_indices = @transform_0, window_bounds = array<i64: 16, 128>}, {transform_indices = @transform_1, window_bounds = array<i64: 16, 128>}]} {
    %c0 = arith.constant 0 : index
    %c0_0 = arith.constant 0 : index
    %0 = vector.load %arg1[%c0, %c0_0] : memref<16x128xf32, #tpu.memory_space<vmem>>, vector<16x128xf32>
    %cst = arith.constant 0.000000e+00 : f32
    %1 = vector.broadcast %cst : f32 to vector<16x128xf32>
    %2 = arith.subf %1, %0 : vector<16x128xf32>
    %3 = math.exp %2 : vector<16x128xf32>
    %cst_1 = arith.constant 1.000000e+00 : f32
    %4 = vector.broadcast %cst_1 : f32 to vector<16x128xf32>
    %5 = arith.addf %4, %3 : vector<16x128xf32>
    %cst_2 = arith.constant 1.000000e+00 : f32
    %6 = vector.broadcast %cst_2 : f32 to vector<16x128xf32>
    %7 = arith.divf %6, %5 : vector<16x128xf32>
    %8 = arith.mulf %0, %7 : vector<16x128xf32>
    %cst_3 = arith.constant 0.000000e+00 : f32
    %9 = vector.broadcast %cst_3 : f32 to vector<16x128xf32>
    %10 = arith.subf %9, %8 : vector<16x128xf32>
    %11 = math.exp %10 : vector<16x128xf32>
    %cst_4 = arith.constant 1.000000e+00 : f32
    %12 = vector.broadcast %cst_4 : f32 to vector<16x128xf32>
    %13 = arith.addf %12, %11 : vector<16x128xf32>
    %cst_5 = arith.constant 1.000000e+00 : f32
    %14 = vector.broadcast %cst_5 : f32 to vector<16x128xf32>
    %15 = arith.divf %14, %13 : vector<16x128xf32>
    %16 = arith.mulf %0, %15 : vector<16x128xf32>
    %c0_6 = arith.constant 0 : index
    %c0_7 = arith.constant 0 : index
    %17 = vector.load %arg2[%c0_6, %c0_7] : memref<16x128xf32, #tpu.memory_space<vmem>>, vector<16x128xf32>
    tpu.vector_store %arg2[%c0_6, %c0_7], %16 {strides = array<i32>} : memref<16x128xf32, #tpu.memory_space<vmem>>, vector<16x128xf32>,
    return
  }
  func.func @transform_0(%arg0: i32) -> (i32, i32) {
    %c0_i32 = arith.constant 0 : i32
    %c0_i32_0 = arith.constant 0 : i32
    return %arg0, %c0_i32 : i32, i32
  }
  func.func @transform_1(%arg0: i32) -> (i32, i32) {
    %c0_i32 = arith.constant 0 : i32
    %c0_i32_0 = arith.constant 0 : i32
    return %arg0, %c0_i32 : i32, i32
  }
}

</mosaic_0001>

<llo_original>
// kernel: tpu_custom_call.1
$region0: #{tpu_custom_call.1}
  #allocation0 [shape = 'u32[]', space=smem, size = 0x4, offset = 0x4, fixed_abs, tag = 'smem constant byte address 0x4 - core index']
  #allocation1 [shape = 'u32[144,128]{1,0:T(1,128)}', space=vmem, size = 0x12000, scoped, tag = 'internal scratch']
  %s0 = inlined_call_operand.hbm [shape: f32[16,128], index: 0, kind: input, shape index: {}]
  %s1 = inlined_call_operand.hbm [shape: f32[16,128], index: 1, kind: output, shape index: {}]
  %s2 = sld [smem:[#allocation0]]
  $region18: #{tpu_custom_call.1} parent=0
    _
  %s4 = ssub.s32 1, %s2
  %s5 = scalar_select 0, %s4, %s2
  $region1: #{tpu_custom_call.1} parent=0
    #allocation2 [shape = 'u8[8192]{0}', space=vmem, size = 0x2000, scoped, tag = 'input window, operand 0, single buffered']
    #allocation3 [shape = 's32[1]{0}', space=sflag, size = 0x4, scoped, tag = 'scoped memory for tpu_custom_call.1']
    #allocation4 [shape = 's32[1]{0}', space=sflag, size = 0x4, scoped, tag = 'scoped memory for tpu_custom_call.1']
    #allocation5 [shape = 'u8[8192]{0}', space=vmem, size = 0x2000, scoped, tag = 'output window, operand 0, single buffered']
    %6 = vsyncpa [#allocation3], 0
    %7 = vsyncpa [#allocation4], 0
    // Predicated region
    $region2: #{tpu_custom_call.1} parent=1 // pred_check
      _
    $region3: #{tpu_custom_call.1} parent=1 // pred_check_branch
      %9 = sbr.rel (0) target = $region5
    $region4: #{tpu_custom_call.1} parent=1 // pred_region
      %s11 = ssub.s32 256, 256
      %12 = vsyncadd [#allocation3], %s11
      %s13 = sshll.u32 [#allocation2], 4
      %s14 = int_to_ptr.vmem [resolvable:$true] %s13
      %19 = dma.hbm_to_vmem [thread:$0]  %s0, 256, %s14, [#allocation3], 128, 128, 8
    $region5: #{tpu_custom_call.1} parent=1 // pred_fallthru
      _
    // Predicated region
    $region6: #{tpu_custom_call.1} parent=1 // pred_check
      _
    $region7: #{tpu_custom_call.1} parent=1 // pred_check_branch
      %21 = sbr.rel (0) target = $region9
    $region8: #{tpu_custom_call.1} parent=1 // pred_region
      %22 = dma.done [#allocation3], 256
    $region9: #{tpu_custom_call.1} parent=1 // pred_fallthru
      _
    %v23 = vld [vmem:[#allocation2] sm:$0xff]
    %v24 = vld [vmem:[#allocation2 + $0x8] sm:$0xff]
    %v25 = vsub.f32 0.0, %v23
    %v26 = vsub.f32 0.0, %v24
    %v27 = vmul.f32 %v25, 1.442695
    %v28 = vpow.pop %v27
    %v29 = vmul.f32 %v26, 1.442695
    %v30 = vpow.pop %v29
    %v31 = vadd.f32 %v28, 1.0
    %v32 = vadd.f32 %v30, 1.0
    %v33 = vrcp.pop %v31
    %v34 = vmul.f32 1.0, %v33
    %v35 = vrcp.pop %v32
    %v36 = vmul.f32 1.0, %v35
    %v37 = vmul.f32 %v23, %v34
    %v38 = vmul.f32 %v24, %v36
    %v39 = vsub.f32 0.0, %v37
    %v40 = vsub.f32 0.0, %v38
    %v41 = vmul.f32 %v39, 1.442695
    %v42 = vpow.pop %v41
    %v43 = vmul.f32 %v40, 1.442695
    %v44 = vpow.pop %v43
    %v45 = vadd.f32 %v42, 1.0
    %v46 = vadd.f32 %v44, 1.0
    %v47 = vrcp.pop %v45
    %v48 = vmul.f32 1.0, %v47
    %v49 = vrcp.pop %v46
    %v50 = vmul.f32 1.0, %v49
    %v51 = vmul.f32 %v23, %v48
    %v52 = vmul.f32 %v24, %v50
    %53 = vst [vmem:[#allocation5] sm:$0xff] %v51
    %54 = vst [vmem:[#allocation5 + $0x8] sm:$0xff] %v52
    // Predicated region
    $region10: #{tpu_custom_call.1} parent=1 // pred_check
      _
    $region11: #{tpu_custom_call.1} parent=1 // pred_check_branch
      %56 = sbr.rel (0) target = $region13
    $region12: #{tpu_custom_call.1} parent=1 // pred_region
      %s58 = ssub.s32 256, 256
      %59 = vsyncadd [#allocation4], %s58
      %s60 = sshll.u32 [#allocation5], 4
      %s61 = int_to_ptr.vmem [resolvable:$true] %s60
      %66 = dma.vmem_to_hbm [thread:$0]  %s61, 256, %s1, [#allocation4], 128, 128, 8
    $region13: #{tpu_custom_call.1} parent=1 // pred_fallthru
      _
    // Predicated region
    $region14: #{tpu_custom_call.1} parent=1 // pred_check
      _
    $region15: #{tpu_custom_call.1} parent=1 // pred_check_branch
      %68 = sbr.rel (0) target = $region17
    $region16: #{tpu_custom_call.1} parent=1 // pred_region
      %69 = dma.done [#allocation4], 256
    $region17: #{tpu_custom_call.1} parent=1 // pred_fallthru
      _
    %70 = vsyncpa [#allocation3], 1
    %71 = vsyncpa [#allocation4], 1

</llo_original>
